<compile_context>
chip_gen: v5e
topology: v5e:2x2
jax: 0.10.0
libtpu: 0.0.40
codegen_flags: <defaults>
</compile_context>

<pallas_src>
import functools

import numpy as np
import jax
import jax.numpy as jnp
from jax.experimental import pallas as pl
from jax.experimental.pallas import tpu as pltpu


def _round_up(n, m):
    return ((n + m - 1) // m) * m


def _cdiv(a, b):
    return (a + b - 1) // b


def _tensorcores_per_chip():
    """2 on v7x-class chips (2 TCs/chip), else 1.  Best-effort string sniff."""
    try:
        kind = jax.devices()[0].device_kind.lower()
    except Exception:
        return 1
    return 2 if ("v7" in kind or "tpu7" in kind) else 1


# -----------------------------------------------------------------------------
# Kernel
# -----------------------------------------------------------------------------
def dense_embedder_kernel(x_ref, *refs, num_layers):
    """Fused MLP: (num_layers-1) x [bf16 matmul + f32 bias + LeakyReLU] + head.

    x_ref:            (tb, C) bf16 activations.
    refs[:L]:         per-layer bf16 weights, layer l is (K_pad_l, N_pad_l).
    refs[L:2L]:       per-layer f32 biases, layer l is (1, N_pad_l).
    refs[2L]:         (tb, N_pad_last) f32 lane-dense output.
    Padded lanes stay exactly zero through every layer (zero weight cols,
    zero bias, LeakyReLU(0) == 0), so no masking is needed.
    """
    w_refs = refs[:num_layers]
    b_refs = refs[num_layers:2 * num_layers]
    out_ref = refs[2 * num_layers]

    h = x_ref[...]                                            # bf16
    acc = None
    for l in range(num_layers):
        acc = jnp.dot(h, w_refs[l][...],
                      preferred_element_type=jnp.float32)     # bf16 MXU, f32 acc
        acc = acc + b_refs[l][...]                            # exact f32 bias
        if l < num_layers - 1:
            acc = jnp.maximum(acc, 0.2 * acc)                 # LeakyReLU(0.2), f32
            h = acc.astype(jnp.bfloat16)                      # bf16 for next MXU
    out_ref[...] = acc                                        # f32 lane-dense store


# -----------------------------------------------------------------------------
# Parameter construction / packing
# -----------------------------------------------------------------------------
def make_dense_embedder_params(key, input_dim, up_dim=32, depth=4,
                               num_classes_list=(2, 3)):
    """Deterministic f32 init matching the module's shapes.

    Conv2d(c_in, c_out, 1) weight (c_out, c_in, 1, 1) stored transposed as
    (c_in, c_out); nn.Linear(up_dim, n_out) weight stored as (up_dim, n_out).
    Biases kept 2D (1, c_out).
    """
    dims = np.linspace(input_dim, up_dim, depth).astype(int)
    params = []
    for l in range(len(dims) - 1):
        key, kw, kb = jax.random.split(key, 3)
        fan_in = int(dims[l])
        bound = 1.0 / np.sqrt(fan_in)
        w = jax.random.uniform(kw, (int(dims[l]), int(dims[l + 1])),
                               jnp.float32, -bound, bound)
        b = jax.random.uniform(kb, (1, int(dims[l + 1])),
                               jnp.float32, -bound, bound)
        params.extend([w, b])
    key, kw, kb = jax.random.split(key, 3)
    n_out = int(sum(num_classes_list))
    bound = 1.0 / np.sqrt(up_dim)
    wh = jax.random.uniform(kw, (up_dim, n_out), jnp.float32, -bound, bound)
    bh = jax.random.uniform(kb, (1, n_out), jnp.float32, -bound, bound)
    params.extend([wh, bh])
    return params, dims


def pack_dense_embedder_params(params):
    """Pad each layer independently and cast weights to bf16.

    Layer l weight (K_l, N_l) -> bf16 (K_pad_l, round_up(N_l, 128)) where
    K_pad_0 == K_0 (x is passed with its true lane width) and
    K_pad_l == N_pad_{l-1} thereafter.  Biases stay f32, zero-padded to
    (1, N_pad_l).  Returns (w_list_bf16, b_list_f32, n_out).
    """
    ws = params[0::2]
    bs = params[1::2]
    w_list, b_list = [], []
    prev_n_pad = None
    for l, (w, b) in enumerate(zip(ws, bs)):
        k, n = int(w.shape[0]), int(w.shape[1])
        k_pad = k if l == 0 else prev_n_pad
        n_pad = _round_up(n, 128)
        wp = jnp.zeros((k_pad, n_pad), jnp.float32)
        wp = wp.at[:k, :n].set(w.astype(jnp.float32)).astype(jnp.bfloat16)
        bp = jnp.zeros((1, n_pad), jnp.float32)
        bp = bp.at[:, :n].set(jnp.reshape(b, (1, -1)).astype(jnp.float32))
        w_list.append(wp)
        b_list.append(bp)
        prev_n_pad = n_pad
    n_out = int(ws[-1].shape[1])
    return w_list, b_list, n_out


# -----------------------------------------------------------------------------
# Forward wrapper
# -----------------------------------------------------------------------------
def dense_embedder_forward(x, w_list, b_list, n_out, *, tb_max=1024,
                           use_pallas=True):
    """x: (B, C, 1, 1) NCHW or (B, C). Returns (B, n_out) f32."""
    # Robust flatten (jnp.squeeze would drop the batch axis when B == 1).
    x2d = x.reshape(x.shape[0], -1)
    B, C = x2d.shape
    num_layers = len(w_list)
    assert C == int(w_list[0].shape[0])

    if not use_pallas:
        # Small-B escape hatch: plain XLA dot chain (same bf16/f32 recipe).
        h = x2d.astype(jnp.bfloat16)
        acc = None
        for l in range(num_layers):
            acc = jnp.dot(h, w_list[l],
                          preferred_element_type=jnp.float32) + b_list[l]
            if l < num_layers - 1:
                acc = jnp.maximum(acc, 0.2 * acc)
                h = acc.astype(jnp.bfloat16)
        return acc[:, :n_out]

    # ---- Balanced batch tiling (minimizes padding; >=2 tiles on v7x). ----
    cores = _tensorcores_per_chip()
    num_tiles = max(_cdiv(B, tb_max), 1)
    if cores > 1 and B >= 16:
        num_tiles = max(num_tiles, cores)
    tb = _round_up(_cdiv(B, num_tiles), 8)
    b_pad = num_tiles * tb

    x_bf16 = x2d.astype(jnp.bfloat16)
    if b_pad > B:
        x_bf16 = jnp.pad(x_bf16, ((0, b_pad - B), (0, 0)))

    n_out_pad = int(w_list[-1].shape[1])

    in_specs = [pl.BlockSpec((tb, C), lambda i: (i, 0))]
    # Weights / biases: constant index_map -> single DMA, VMEM-resident.
    for w in w_list:
        in_specs.append(pl.BlockSpec(tuple(int(d) for d in w.shape),
                                     lambda i: (0, 0)))
    for b in b_list:
        in_specs.append(pl.BlockSpec(tuple(int(d) for d in b.shape),
                                     lambda i: (0, 0)))
    out_spec = pl.BlockSpec((tb, n_out_pad), lambda i: (i, 0))

    flops = 2 * b_pad * sum(int(w.shape[0]) * int(w.shape[1]) for w in w_list)
    bytes_accessed = int(x_bf16.size * 2
                         + sum(int(w.size) for w in w_list) * 2
                         + sum(int(b.size) for b in b_list) * 4
                         + b_pad * n_out_pad * 4)

    out_padded = pl.pallas_call(
        functools.partial(dense_embedder_kernel, num_layers=num_layers),
        out_shape=jax.ShapeDtypeStruct((b_pad, n_out_pad), jnp.float32),
        grid_spec=pltpu.PrefetchScalarGridSpec(
            num_scalar_prefetch=0,
            grid=(num_tiles,),
            in_specs=in_specs,
            out_specs=out_spec,
        ),
        compiler_params=pltpu.CompilerParams(
            dimension_semantics=("parallel",)),
        cost_estimate=pl.CostEstimate(
            flops=flops, transcendentals=0, bytes_accessed=bytes_accessed),
    )(x_bf16, *w_list, *b_list)

    # Free XLA glue: drop batch/lane padding.
    return out_padded[:B, :n_out]


# -----------------------------------------------------------------------------
# Pure-JAX f32 reference mirroring the PyTorch forward
# -----------------------------------------------------------------------------
def reference_forward(x, params):
    h = x.reshape(x.shape[0], -1).astype(jnp.float32)
    ws, bs = params[0::2], params[1::2]
    for w, b in zip(ws[:-1], bs[:-1]):
        h = h @ w + b
        h = jnp.where(h > 0, h, 0.2 * h)
    return h @ ws[-1] + bs[-1]


if __name__ == "__main__":
    key = jax.random.PRNGKey(0)
    kx, kp = jax.random.split(key)

    B, input_dim, up_dim, depth = 8, 8, 32, 4
    num_classes_list = (2, 3)

    # NCHW input with 1x1 spatial, as the module's conv stack expects.
    x = jax.random.normal(kx, (B, input_dim, 1, 1), jnp.float32)

    params, dims = make_dense_embedder_params(
        kp, input_dim, up_dim=up_dim, depth=depth,
        num_classes_list=num_classes_list)

    w_list, b_list, n_out = pack_dense_embedder_params(params)

    out = dense_embedder_forward(x, w_list, b_list, n_out)
    out = jax.block_until_ready(out)

    ref = reference_forward(x, params)
    # Kernel feeds the MXU bf16 (weights + activations, f32 accumulate/bias),
    # so tolerance vs. the f32 reference is bf16-level.
    np.testing.assert_allclose(np.asarray(out), np.asarray(ref),
                               rtol=3e-2, atol=3e-2)

    assert out.shape == (B, sum(num_classes_list))
    print("KERNEL_OK")
</pallas_src>

<mosaic_0001>
module attributes {stable_mosaic.version = 11 : i64} {
  func.func @dense_embedder_kernel(%arg0: i32, %arg1: memref<8x8xbf16, #tpu.memory_space<vmem>>, %arg2: memref<8x128xbf16, #tpu.memory_space<vmem>>, %arg3: memref<128x128xbf16, #tpu.memory_space<vmem>>, %arg4: memref<128x128xbf16, #tpu.memory_space<vmem>>, %arg5: memref<128x128xbf16, #tpu.memory_space<vmem>>, %arg6: memref<1x128xf32, #tpu.memory_space<vmem>>, %arg7: memref<1x128xf32, #tpu.memory_space<vmem>>, %arg8: memref<1x128xf32, #tpu.memory_space<vmem>>, %arg9: memref<1x128xf32, #tpu.memory_space<vmem>>, %arg10: memref<8x128xf32, #tpu.memory_space<vmem>>) attributes {dimension_semantics = [#tpu.dimension_semantics<parallel>], iteration_bounds = array<i64: 1>, scalar_prefetch = 0 : i64, scratch_operands = 0 : i64, tpu.core_type = #tpu.core_type<tc>, window_params = [{transform_indices = @transform_0, window_bounds = array<i64: 8, 8>}, {pipeline_mode = #tpu.pipeline_mode<synchronous>, transform_indices = @transform_1, window_bounds = array<i64: 8, 128>}, {pipeline_mode = #tpu.pipeline_mode<synchronous>, transform_indices = @transform_2, window_bounds = array<i64: 128, 128>}, {pipeline_mode = #tpu.pipeline_mode<synchronous>, transform_indices = @transform_3, window_bounds = array<i64: 128, 128>}, {pipeline_mode = #tpu.pipeline_mode<synchronous>, transform_indices = @transform_4, window_bounds = array<i64: 128, 128>}, {pipeline_mode = #tpu.pipeline_mode<synchronous>, transform_indices = @transform_5, window_bounds = array<i64: 1, 128>}, {pipeline_mode = #tpu.pipeline_mode<synchronous>, transform_indices = @transform_6, window_bounds = array<i64: 1, 128>}, {pipeline_mode = #tpu.pipeline_mode<synchronous>, transform_indices = @transform_7, window_bounds = array<i64: 1, 128>}, {pipeline_mode = #tpu.pipeline_mode<synchronous>, transform_indices = @transform_8, window_bounds = array<i64: 1, 128>}, {transform_indices = @transform_9, window_bounds = array<i64: 8, 128>}]} {
    %c0 = arith.constant 0 : index
    %c0_0 = arith.constant 0 : index
    %0 = vector.load %arg1[%c0, %c0_0] : memref<8x8xbf16, #tpu.memory_space<vmem>>, vector<8x8xbf16>
    %c0_1 = arith.constant 0 : index
    %c0_2 = arith.constant 0 : index
    %1 = vector.load %arg2[%c0_1, %c0_2] : memref<8x128xbf16, #tpu.memory_space<vmem>>, vector<8x128xbf16>
    %cst = arith.constant dense<0.000000e+00> : vector<8x128xf32>
    %2 = tpu.matmul %0, %1, %cst {dimension_numbers = #tpu.dot_dimension_numbers<[1], [0], [0], [1], [0, 0, 1, 1], [], []>} : vector<8x8xbf16>, vector<8x128xbf16>, vector<8x128xf32> -> vector<8x128xf32>
    %c0_3 = arith.constant 0 : index
    %c0_4 = arith.constant 0 : index
    %3 = vector.load %arg6[%c0_3, %c0_4] : memref<1x128xf32, #tpu.memory_space<vmem>>, vector<1x128xf32>
    %4 = vector.broadcast %3 : vector<1x128xf32> to vector<8x128xf32>
    %5 = arith.addf %2, %4 : vector<8x128xf32>
    %cst_5 = arith.constant 2.000000e-01 : f32
    %6 = vector.broadcast %cst_5 : f32 to vector<8x128xf32>
    %7 = arith.mulf %6, %5 : vector<8x128xf32>
    %8 = arith.maximumf %5, %7 : vector<8x128xf32>
    %9 = arith.truncf %8 : vector<8x128xf32> to vector<8x128xbf16>
    %c0_6 = arith.constant 0 : index
    %c0_7 = arith.constant 0 : index
    %10 = vector.load %arg3[%c0_6, %c0_7] : memref<128x128xbf16, #tpu.memory_space<vmem>>, vector<128x128xbf16>
    %cst_8 = arith.constant dense<0.000000e+00> : vector<8x128xf32>
    %11 = tpu.matmul %9, %10, %cst_8 {dimension_numbers = #tpu.dot_dimension_numbers<[1], [0], [0], [1], [0, 0, 1, 1], [], []>} : vector<8x128xbf16>, vector<128x128xbf16>, vector<8x128xf32> -> vector<8x128xf32>
    %c0_9 = arith.constant 0 : index
    %c0_10 = arith.constant 0 : index
    %12 = vector.load %arg7[%c0_9, %c0_10] : memref<1x128xf32, #tpu.memory_space<vmem>>, vector<1x128xf32>
    %13 = vector.broadcast %12 : vector<1x128xf32> to vector<8x128xf32>
    %14 = arith.addf %11, %13 : vector<8x128xf32>
    %cst_11 = arith.constant 2.000000e-01 : f32
    %15 = vector.broadcast %cst_11 : f32 to vector<8x128xf32>
    %16 = arith.mulf %15, %14 : vector<8x128xf32>
    %17 = arith.maximumf %14, %16 : vector<8x128xf32>
    %18 = arith.truncf %17 : vector<8x128xf32> to vector<8x128xbf16>
    %c0_12 = arith.constant 0 : index
    %c0_13 = arith.constant 0 : index
    %19 = vector.load %arg4[%c0_12, %c0_13] : memref<128x128xbf16, #tpu.memory_space<vmem>>, vector<128x128xbf16>
    %cst_14 = arith.constant dense<0.000000e+00> : vector<8x128xf32>
    %20 = tpu.matmul %18, %19, %cst_14 {dimension_numbers = #tpu.dot_dimension_numbers<[1], [0], [0], [1], [0, 0, 1, 1], [], []>} : vector<8x128xbf16>, vector<128x128xbf16>, vector<8x128xf32> -> vector<8x128xf32>
    %c0_15 = arith.constant 0 : index
    %c0_16 = arith.constant 0 : index
    %21 = vector.load %arg8[%c0_15, %c0_16] : memref<1x128xf32, #tpu.memory_space<vmem>>, vector<1x128xf32>
    %22 = vector.broadcast %21 : vector<1x128xf32> to vector<8x128xf32>
    %23 = arith.addf %20, %22 : vector<8x128xf32>
    %cst_17 = arith.constant 2.000000e-01 : f32
    %24 = vector.broadcast %cst_17 : f32 to vector<8x128xf32>
    %25 = arith.mulf %24, %23 : vector<8x128xf32>
    %26 = arith.maximumf %23, %25 : vector<8x128xf32>
    %27 = arith.truncf %26 : vector<8x128xf32> to vector<8x128xbf16>
    %c0_18 = arith.constant 0 : index
    %c0_19 = arith.constant 0 : index
    %28 = vector.load %arg5[%c0_18, %c0_19] : memref<128x128xbf16, #tpu.memory_space<vmem>>, vector<128x128xbf16>
    %cst_20 = arith.constant dense<0.000000e+00> : vector<8x128xf32>
    %29 = tpu.matmul %27, %28, %cst_20 {dimension_numbers = #tpu.dot_dimension_numbers<[1], [0], [0], [1], [0, 0, 1, 1], [], []>} : vector<8x128xbf16>, vector<128x128xbf16>, vector<8x128xf32> -> vector<8x128xf32>
    %c0_21 = arith.constant 0 : index
    %c0_22 = arith.constant 0 : index
    %30 = vector.load %arg9[%c0_21, %c0_22] : memref<1x128xf32, #tpu.memory_space<vmem>>, vector<1x128xf32>
    %31 = vector.broadcast %30 : vector<1x128xf32> to vector<8x128xf32>
    %32 = arith.addf %29, %31 : vector<8x128xf32>
    %c0_23 = arith.constant 0 : index
    %c0_24 = arith.constant 0 : index
    %33 = vector.load %arg10[%c0_23, %c0_24] : memref<8x128xf32, #tpu.memory_space<vmem>>, vector<8x128xf32>
    tpu.vector_store %arg10[%c0_23, %c0_24], %32 {strides = array<i32>} : memref<8x128xf32, #tpu.memory_space<vmem>>, vector<8x128xf32>,
    return
  }
  func.func @transform_0(%arg0: i32) -> (i32, i32) {
    %c0_i32 = arith.constant 0 : i32
    %c0_i32_0 = arith.constant 0 : i32
    return %arg0, %c0_i32 : i32, i32
  }
  func.func @transform_1(%arg0: i32) -> (i32, i32) {
    %c0_i32 = arith.constant 0 : i32
    %c0_i32_0 = arith.constant 0 : i32
    %c0_i32_1 = arith.constant 0 : i32
    return %c0_i32, %c0_i32_0 : i32, i32
  }
  func.func @transform_2(%arg0: i32) -> (i32, i32) {
    %c0_i32 = arith.constant 0 : i32
    %c0_i32_0 = arith.constant 0 : i32
    %c0_i32_1 = arith.constant 0 : i32
    return %c0_i32, %c0_i32_0 : i32, i32
  }
  func.func @transform_3(%arg0: i32) -> (i32, i32) {
    %c0_i32 = arith.constant 0 : i32
    %c0_i32_0 = arith.constant 0 : i32
    %c0_i32_1 = arith.constant 0 : i32
    return %c0_i32, %c0_i32_0 : i32, i32
  }
  func.func @transform_4(%arg0: i32) -> (i32, i32) {
    %c0_i32 = arith.constant 0 : i32
    %c0_i32_0 = arith.constant 0 : i32
    %c0_i32_1 = arith.constant 0 : i32
    return %c0_i32, %c0_i32_0 : i32, i32
  }
  func.func @transform_5(%arg0: i32) -> (i32, i32) {
    %c0_i32 = arith.constant 0 : i32
    %c0_i32_0 = arith.constant 0 : i32
    %c0_i32_1 = arith.constant 0 : i32
    return %c0_i32, %c0_i32_0 : i32, i32
  }
  func.func @transform_6(%arg0: i32) -> (i32, i32) {
    %c0_i32 = arith.constant 0 : i32
    %c0_i32_0 = arith.constant 0 : i32
    %c0_i32_1 = arith.constant 0 : i32
    return %c0_i32, %c0_i32_0 : i32, i32
  }
  func.func @transform_7(%arg0: i32) -> (i32, i32) {
    %c0_i32 = arith.constant 0 : i32
    %c0_i32_0 = arith.constant 0 : i32
    %c0_i32_1 = arith.constant 0 : i32
    return %c0_i32, %c0_i32_0 : i32, i32
  }
  func.func @transform_8(%arg0: i32) -> (i32, i32) {
    %c0_i32 = arith.constant 0 : i32
    %c0_i32_0 = arith.constant 0 : i32
    %c0_i32_1 = arith.constant 0 : i32
    return %c0_i32, %c0_i32_0 : i32, i32
  }
  func.func @transform_9(%arg0: i32) -> (i32, i32) {
    %c0_i32 = arith.constant 0 : i32
    %c0_i32_0 = arith.constant 0 : i32
    return %arg0, %c0_i32 : i32, i32
  }
}

</mosaic_0001>

<llo_original>
// kernel: tpu_custom_call.1
$region0: #{tpu_custom_call.1}
  #allocation0 [shape = 'u32[]', space=smem, size = 0x4, offset = 0x4, fixed_abs, tag = 'smem constant byte address 0x4 - core index']
  #allocation1 [shape = 'u32[72,128]{1,0:T(1,128)}', space=vmem, size = 0x9000, scoped, tag = 'internal scratch']
  %s0 = inlined_call_operand.hbm [shape: bf16[8,8], index: 0, kind: input, shape index: {}]
  %s1 = inlined_call_operand.hbm [shape: bf16[8,128], index: 1, kind: input, shape index: {}]
  %s2 = inlined_call_operand.hbm [shape: bf16[128,128], index: 2, kind: input, shape index: {}]
  %s3 = inlined_call_operand.hbm [shape: bf16[128,128], index: 3, kind: input, shape index: {}]
  %s4 = inlined_call_operand.hbm [shape: bf16[128,128], index: 4, kind: input, shape index: {}]
  %s5 = inlined_call_operand.vmem [shape: f32[1,128], index: 5, kind: input, shape index: {}]
  %s6 = inlined_call_operand.vmem [shape: f32[1,128], index: 6, kind: input, shape index: {}]
  %s7 = inlined_call_operand.vmem [shape: f32[1,128], index: 7, kind: input, shape index: {}]
  %s8 = inlined_call_operand.vmem [shape: f32[1,128], index: 8, kind: input, shape index: {}]
  %s9 = inlined_call_operand.hbm [shape: f32[8,128], index: 9, kind: output, shape index: {}]
  %s10 = sld [smem:[#allocation0]]
  $region66: #{tpu_custom_call.1} parent=0
    _
  %s12 = ssub.s32 1, %s10
  %s13 = scalar_select 0, %s12, %s10
  $region1: #{tpu_custom_call.1} parent=0
    #allocation2 [shape = 'u8[2048]{0}', space=vmem, size = 0x800, scoped, tag = 'input window, operand 0, single buffered']
    #allocation3 [shape = 's32[1]{0}', space=sflag, size = 0x4, scoped, tag = 'scoped memory for tpu_custom_call.1']
    #allocation4 [shape = 's32[1]{0}', space=sflag, size = 0x4, scoped, tag = 'scoped memory for tpu_custom_call.1']
    #allocation5 [shape = 'u8[2048]{0}', space=vmem, size = 0x800, scoped, tag = 'input window, operand 1, single buffered']
    #allocation6 [shape = 's32[1]{0}', space=sflag, size = 0x4, scoped, tag = 'scoped memory for tpu_custom_call.1']
    #allocation7 [shape = 'u8[32768]{0}', space=vmem, size = 0x8000, scoped, tag = 'input window, operand 2, single buffered']
    #allocation8 [shape = 'u8[32768]{0}', space=vmem, size = 0x8000, scoped, tag = 'input window, operand 3, single buffered']
    #allocation9 [shape = 's32[1]{0}', space=sflag, size = 0x4, scoped, tag = 'scoped memory for tpu_custom_call.1']
    #allocation10 [shape = 'u8[32768]{0}', space=vmem, size = 0x8000, scoped, tag = 'input window, operand 4, single buffered']
    #allocation11 [shape = 'u8[4096]{0}', space=vmem, size = 0x1000, scoped, tag = 'output window, operand 0, single buffered']
    %14 = vsyncpa [#allocation3], 0
    %15 = vsyncpa [#allocation6], 0
    %16 = vsyncpa [#allocation9], 0
    %17 = vsyncpa [#allocation4], 0
    // Predicated region
    $region2: #{tpu_custom_call.1} parent=1 // pred_check
      _
    $region3: #{tpu_custom_call.1} parent=1 // pred_check_branch
      %19 = sbr.rel (0) target = $region5
    $region4: #{tpu_custom_call.1} parent=1 // pred_region
      %21 = vsyncadd [#allocation3], 0
      %s23 = sshll.u32 %s0, 4
      %s24 = int_to_ptr.hbm [resolvable:$true] %s23
      %s25 = sshll.u32 [#allocation2], 4
      %s26 = int_to_ptr.vmem [resolvable:$true] %s25
      %28 = dma.hbm_to_vmem [thread:$0]  %s24, 64, %s26, [#allocation3]
    $region5: #{tpu_custom_call.1} parent=1 // pred_fallthru
      _
    // Predicated region
    $region6: #{tpu_custom_call.1} parent=1 // pred_check
      _
    $region7: #{tpu_custom_call.1} parent=1 // pred_check_branch
      %30 = sbr.rel (0) target = $region9
    $region8: #{tpu_custom_call.1} parent=1 // pred_region
      %32 = vsyncadd [#allocation6], 0
      %s34 = sshll.u32 %s1, 4
      %s35 = int_to_ptr.hbm [resolvable:$true] %s34
      %s36 = sshll.u32 [#allocation5], 4
      %s37 = int_to_ptr.vmem [resolvable:$true] %s36
      %39 = dma.hbm_to_vmem [thread:$0]  %s35, 64, %s37, [#allocation6]
    $region9: #{tpu_custom_call.1} parent=1 // pred_fallthru
      _
    // Predicated region
    $region10: #{tpu_custom_call.1} parent=1 // pred_check
      _
    $region11: #{tpu_custom_call.1} parent=1 // pred_check_branch
      %41 = sbr.rel (0) target = $region13
    $region12: #{tpu_custom_call.1} parent=1 // pred_region
      %43 = vsyncadd [#allocation6], 0
      %s44 = sshll.u32 %s2, 4
      %s45 = int_to_ptr.hbm [resolvable:$true] %s44
      %s46 = sshll.u32 [#allocation7], 4
      %s47 = int_to_ptr.vmem [resolvable:$true] %s46
      %52 = dma.hbm_to_vmem [thread:$0]  %s45, 1024, %s47, [#allocation6], 64, 64, 4
    $region13: #{tpu_custom_call.1} parent=1 // pred_fallthru
      _
    // Predicated region
    $region14: #{tpu_custom_call.1} parent=1 // pred_check
      _
    $region15: #{tpu_custom_call.1} parent=1 // pred_check_branch
      %54 = sbr.rel (0) target = $region17
    $region16: #{tpu_custom_call.1} parent=1 // pred_region
      %56 = vsyncadd [#allocation9], 0
      %s57 = sshll.u32 %s3, 4
      %s58 = int_to_ptr.hbm [resolvable:$true] %s57
      %s59 = sshll.u32 [#allocation8], 4
      %s60 = int_to_ptr.vmem [resolvable:$true] %s59
      %65 = dma.hbm_to_vmem [thread:$0]  %s58, 1024, %s60, [#allocation9], 64, 64, 4
    $region17: #{tpu_custom_call.1} parent=1 // pred_fallthru
      _
    // Predicated region
    $region18: #{tpu_custom_call.1} parent=1 // pred_check
      _
    $region19: #{tpu_custom_call.1} parent=1 // pred_check_branch
      %67 = sbr.rel (0) target = $region21
    $region20: #{tpu_custom_call.1} parent=1 // pred_region
      %69 = vsyncadd [#allocation9], 0
      %s70 = sshll.u32 %s4, 4
      %s71 = int_to_ptr.hbm [resolvable:$true] %s70
      %s72 = sshll.u32 [#allocation10], 4
      %s73 = int_to_ptr.vmem [resolvable:$true] %s72
      %78 = dma.hbm_to_vmem [thread:$0]  %s71, 1024, %s73, [#allocation9], 64, 64, 4
    $region21: #{tpu_custom_call.1} parent=1 // pred_fallthru
      _
    // Predicated region
    $region22: #{tpu_custom_call.1} parent=1 // pred_check
      _
    $region23: #{tpu_custom_call.1} parent=1 // pred_check_branch
      %80 = sbr.rel (0) target = $region25
    $region24: #{tpu_custom_call.1} parent=1 // pred_region
      _
    $region25: #{tpu_custom_call.1} parent=1 // pred_fallthru
      _
    // Predicated region
    $region26: #{tpu_custom_call.1} parent=1 // pred_check
      _
    $region27: #{tpu_custom_call.1} parent=1 // pred_check_branch
      %82 = sbr.rel (0) target = $region29
    $region28: #{tpu_custom_call.1} parent=1 // pred_region
      _
    $region29: #{tpu_custom_call.1} parent=1 // pred_fallthru
      _
    // Predicated region
    $region30: #{tpu_custom_call.1} parent=1 // pred_check
      _
    $region31: #{tpu_custom_call.1} parent=1 // pred_check_branch
      %84 = sbr.rel (0) target = $region33
    $region32: #{tpu_custom_call.1} parent=1 // pred_region
      _
    $region33: #{tpu_custom_call.1} parent=1 // pred_fallthru
      _
    // Predicated region
    $region34: #{tpu_custom_call.1} parent=1 // pred_check
      _
    $region35: #{tpu_custom_call.1} parent=1 // pred_check_branch
      %86 = sbr.rel (0) target = $region37
    $region36: #{tpu_custom_call.1} parent=1 // pred_region
      _
    $region37: #{tpu_custom_call.1} parent=1 // pred_fallthru
      _
    // Predicated region
    $region38: #{tpu_custom_call.1} parent=1 // pred_check
      _
    $region39: #{tpu_custom_call.1} parent=1 // pred_check_branch
      %88 = sbr.rel (0) target = $region41
    $region40: #{tpu_custom_call.1} parent=1 // pred_region
      %90 = dma.done [#allocation3], 64
    $region41: #{tpu_custom_call.1} parent=1 // pred_fallthru
      _
    // Predicated region
    $region42: #{tpu_custom_call.1} parent=1 // pred_check
      _
    $region43: #{tpu_custom_call.1} parent=1 // pred_check_branch
      %92 = sbr.rel (0) target = $region45
    $region44: #{tpu_custom_call.1} parent=1 // pred_region
      %94 = dma.done [#allocation6], 64
    $region45: #{tpu_custom_call.1} parent=1 // pred_fallthru
      _
    // Predicated region
    $region46: #{tpu_custom_call.1} parent=1 // pred_check
      _
    $region47: #{tpu_custom_call.1} parent=1 // pred_check_branch
      %96 = sbr.rel (0) target = $region49
    $region48: #{tpu_custom_call.1} parent=1 // pred_region
      %98 = dma.done [#allocation6], 1024
    $region49: #{tpu_custom_call.1} parent=1 // pred_fallthru
      _
    // Predicated region
    $region50: #{tpu_custom_call.1} parent=1 // pred_check
      _
    $region51: #{tpu_custom_call.1} parent=1 // pred_check_branch
      %100 = sbr.rel (0) target = $region53
    $region52: #{tpu_custom_call.1} parent=1 // pred_region
      %102 = dma.done [#allocation9], 1024
    $region53: #{tpu_custom_call.1} parent=1 // pred_fallthru
      _
    // Predicated region
    $region54: #{tpu_custom_call.1} parent=1 // pred_check
      _
    $region55: #{tpu_custom_call.1} parent=1 // pred_check_branch
      %104 = sbr.rel (0) target = $region57
    $region56: #{tpu_custom_call.1} parent=1 // pred_region
      %106 = dma.done [#allocation9], 1024
    $region57: #{tpu_custom_call.1} parent=1 // pred_fallthru
      _
    %v108 = vld [vmem:[#allocation2] sm:$0xf]
    %v109 = vld [vmem:[#allocation5] sm:$0xf]
    %v110 = vld [vmem:[%s5] sm:$0x1]
    %v112 = vperm.slane %v110, 0
    %vm114 = vcmask 64512
    %v116 = vsel %vm114, %v108, 0
    %vm118 = vcmask 1043456
    %v120 = vsel %vm118, %v109, 0
    %122 = vmatpush.bf16.msra.mxu0 0
    %123 = vmatpush.bf16.msra.mxu0 0
    %124 = vmatpush.bf16.msra.mxu0 0
    %125 = vmatpush.bf16.msra.mxu0 0
    %126 = vmatpush.bf16.msra.mxu0 0
    %127 = vmatpush.bf16.msra.mxu0 0
    %128 = vmatpush.bf16.msra.mxu0 0
    %129 = vmatpush.bf16.msra.mxu0 %v120
    %130 = vmatmul.bf16.gmra.mxu0 %v116
    %v131 = vpop.f32.mrf.mxu0
    %v132 = vadd.f32 %v112, %v131
    %v133 = vpop.f32.mrf.mxu0
    %134 = vdwg.mxu0
    %v135 = vmul.f32 %v132, 0.2
    %v136 = vmax.f32 %v132, %v135
    %v137 = vpack.c.bf16 %v136, %v136
    %v138 = vld [vmem:[#allocation7] sm:$0xf]
    %v139 = vld [vmem:[#allocation7 + $0x4] sm:$0xf]
    %v140 = vld [vmem:[#allocation7 + $0x8] sm:$0xf]
    %v141 = vld [vmem:[#allocation7 + $0xc] sm:$0xf]
    %v142 = vld [vmem:[#allocation7 + $0x10] sm:$0xf]
    %v143 = vld [vmem:[#allocation7 + $0x14] sm:$0xf]
    %v144 = vld [vmem:[#allocation7 + $0x18] sm:$0xf]
    %v145 = vld [vmem:[#allocation7 + $0x1c] sm:$0xf]
    %v146 = vld [vmem:[#allocation7 + $0x20] sm:$0xf]
    %v147 = vld [vmem:[#allocation7 + $0x24] sm:$0xf]
    %v148 = vld [vmem:[#allocation7 + $0x28] sm:$0xf]
    %v149 = vld [vmem:[#allocation7 + $0x2c] sm:$0xf]
    %v150 = vld [vmem:[#allocation7 + $0x30] sm:$0xf]
    %v151 = vld [vmem:[#allocation7 + $0x34] sm:$0xf]
    %v152 = vld [vmem:[#allocation7 + $0x38] sm:$0xf]
    %v153 = vld [vmem:[#allocation7 + $0x3c] sm:$0xf]
    %v154 = vld [vmem:[%s6] sm:$0x1]
    %v156 = vperm.slane %v154, 0
    %v174 = vunpack.c.l.b16 %v138
    %v175 = vunpack.c.l.b16 %v139
    %v176 = vunpack.c.l.b16 %v140
    %v177 = vunpack.c.l.b16 %v141
    %v178 = vunpack.c.l.b16 %v142
    %v179 = vunpack.c.l.b16 %v143
    %v180 = vunpack.c.l.b16 %v144
    %v181 = vunpack.c.l.b16 %v145
    %v182 = vunpack.c.l.b16 %v146
    %v183 = vunpack.c.l.b16 %v147
    %v184 = vunpack.c.l.b16 %v148
    %v185 = vunpack.c.l.b16 %v149
    %v186 = vunpack.c.l.b16 %v150
    %v187 = vunpack.c.l.b16 %v151
    %v188 = vunpack.c.l.b16 %v152
    %v189 = vunpack.c.l.b16 %v153
    %v190 = vpack.c.b16 %v175, %v174
    %v191 = vpack.c.b16 %v177, %v176
    %v192 = vpack.c.b16 %v179, %v178
    %v193 = vpack.c.b16 %v181, %v180
    %v194 = vpack.c.b16 %v183, %v182
    %v195 = vpack.c.b16 %v185, %v184
    %v196 = vpack.c.b16 %v187, %v186
    %v197 = vpack.c.b16 %v189, %v188
    %206 = vmatpush.bf16.msra.mxu0 %v197
    %207 = vmatpush.bf16.msra.mxu0 %v196
    %208 = vmatpush.bf16.msra.mxu0 %v195
    %209 = vmatpush.bf16.msra.mxu0 %v194
    %210 = vmatpush.bf16.msra.mxu0 %v193
    %211 = vmatpush.bf16.msra.mxu0 %v192
    %212 = vmatpush.bf16.msra.mxu0 %v191
    %213 = vmatpush.bf16.msra.mxu0 %v190
    %214 = vmatmul.bf16.gmra.mxu0 %v137
    %v215 = vpop.f32.mrf.mxu0
    %v216 = vadd.f32 %v156, %v215
    %v217 = vpop.f32.mrf.mxu0
    %218 = vdwg.mxu0
    %v219 = vmul.f32 %v216, 0.2
    %v220 = vmax.f32 %v216, %v219
    %v221 = vpack.c.bf16 %v220, %v220
    %v222 = vld [vmem:[#allocation8] sm:$0xf]
    %v223 = vld [vmem:[#allocation8 + $0x4] sm:$0xf]
    %v224 = vld [vmem:[#allocation8 + $0x8] sm:$0xf]
    %v225 = vld [vmem:[#allocation8 + $0xc] sm:$0xf]
    %v226 = vld [vmem:[#allocation8 + $0x10] sm:$0xf]
    %v227 = vld [vmem:[#allocation8 + $0x14] sm:$0xf]
    %v228 = vld [vmem:[#allocation8 + $0x18] sm:$0xf]
    %v229 = vld [vmem:[#allocation8 + $0x1c] sm:$0xf]
    %v230 = vld [vmem:[#allocation8 + $0x20] sm:$0xf]
    %v231 = vld [vmem:[#allocation8 + $0x24] sm:$0xf]
    %v232 = vld [vmem:[#allocation8 + $0x28] sm:$0xf]
    %v233 = vld [vmem:[#allocation8 + $0x2c] sm:$0xf]
    %v234 = vld [vmem:[#allocation8 + $0x30] sm:$0xf]
    %v235 = vld [vmem:[#allocation8 + $0x34] sm:$0xf]
    %v236 = vld [vmem:[#allocation8 + $0x38] sm:$0xf]
    %v237 = vld [vmem:[#allocation8 + $0x3c] sm:$0xf]
    %v238 = vld [vmem:[%s7] sm:$0x1]
    %v240 = vperm.slane %v238, 0
    %v258 = vunpack.c.l.b16 %v222
    %v259 = vunpack.c.l.b16 %v223
    %v260 = vunpack.c.l.b16 %v224
    %v261 = vunpack.c.l.b16 %v225
    %v262 = vunpack.c.l.b16 %v226
    %v263 = vunpack.c.l.b16 %v227
    %v264 = vunpack.c.l.b16 %v228
    %v265 = vunpack.c.l.b16 %v229
    %v266 = vunpack.c.l.b16 %v230
    %v267 = vunpack.c.l.b16 %v231
    %v268 = vunpack.c.l.b16 %v232
    %v269 = vunpack.c.l.b16 %v233
    %v270 = vunpack.c.l.b16 %v234
    %v271 = vunpack.c.l.b16 %v235
    %v272 = vunpack.c.l.b16 %v236
    %v273 = vunpack.c.l.b16 %v237
    %v274 = vpack.c.b16 %v259, %v258
    %v275 = vpack.c.b16 %v261, %v260
    %v276 = vpack.c.b16 %v263, %v262
    %v277 = vpack.c.b16 %v265, %v264
    %v278 = vpack.c.b16 %v267, %v266
    %v279 = vpack.c.b16 %v269, %v268
    %v280 = vpack.c.b16 %v271, %v270
    %v281 = vpack.c.b16 %v273, %v272
    %290 = vmatpush.bf16.msra.mxu0 %v281
    %291 = vmatpush.bf16.msra.mxu0 %v280
    %292 = vmatpush.bf16.msra.mxu0 %v279
    %293 = vmatpush.bf16.msra.mxu0 %v278
    %294 = vmatpush.bf16.msra.mxu0 %v277
    %295 = vmatpush.bf16.msra.mxu0 %v276
    %296 = vmatpush.bf16.msra.mxu0 %v275
    %297 = vmatpush.bf16.msra.mxu0 %v274
    %298 = vmatmul.bf16.gmra.mxu0 %v221
    %v299 = vpop.f32.mrf.mxu0
    %v300 = vadd.f32 %v240, %v299
    %v301 = vpop.f32.mrf.mxu0
    %302 = vdwg.mxu0
    %v303 = vmul.f32 %v300, 0.2
    %v304 = vmax.f32 %v300, %v303
    %v305 = vpack.c.bf16 %v304, %v304
    %v306 = vld [vmem:[#allocation10] sm:$0xf]
    %v307 = vld [vmem:[#allocation10 + $0x4] sm:$0xf]
    %v308 = vld [vmem:[#allocation10 + $0x8] sm:$0xf]
    %v309 = vld [vmem:[#allocation10 + $0xc] sm:$0xf]
    %v310 = vld [vmem:[#allocation10 + $0x10] sm:$0xf]
    %v311 = vld [vmem:[#allocation10 + $0x14] sm:$0xf]
    %v312 = vld [vmem:[#allocation10 + $0x18] sm:$0xf]
    %v313 = vld [vmem:[#allocation10 + $0x1c] sm:$0xf]
    %v314 = vld [vmem:[#allocation10 + $0x20] sm:$0xf]
    %v315 = vld [vmem:[#allocation10 + $0x24] sm:$0xf]
    %v316 = vld [vmem:[#allocation10 + $0x28] sm:$0xf]
    %v317 = vld [vmem:[#allocation10 + $0x2c] sm:$0xf]
    %v318 = vld [vmem:[#allocation10 + $0x30] sm:$0xf]
    %v319 = vld [vmem:[#allocation10 + $0x34] sm:$0xf]
    %v320 = vld [vmem:[#allocation10 + $0x38] sm:$0xf]
    %v321 = vld [vmem:[#allocation10 + $0x3c] sm:$0xf]
    %v322 = vld [vmem:[%s8] sm:$0x1]
    %v324 = vperm.slane %v322, 0
    %v342 = vunpack.c.l.b16 %v306
    %v343 = vunpack.c.l.b16 %v307
    %v344 = vunpack.c.l.b16 %v308
    %v345 = vunpack.c.l.b16 %v309
    %v346 = vunpack.c.l.b16 %v310
    %v347 = vunpack.c.l.b16 %v311
    %v348 = vunpack.c.l.b16 %v312
    %v349 = vunpack.c.l.b16 %v313
    %v350 = vunpack.c.l.b16 %v314
    %v351 = vunpack.c.l.b16 %v315
    %v352 = vunpack.c.l.b16 %v316
    %v353 = vunpack.c.l.b16 %v317
    %v354 = vunpack.c.l.b16 %v318
    %v355 = vunpack.c.l.b16 %v319
    %v356 = vunpack.c.l.b16 %v320
    %v357 = vunpack.c.l.b16 %v321
    %v358 = vpack.c.b16 %v343, %v342
    %v359 = vpack.c.b16 %v345, %v344
    %v360 = vpack.c.b16 %v347, %v346
    %v361 = vpack.c.b16 %v349, %v348
    %v362 = vpack.c.b16 %v351, %v350
    %v363 = vpack.c.b16 %v353, %v352
    %v364 = vpack.c.b16 %v355, %v354
    %v365 = vpack.c.b16 %v357, %v356
    %374 = vmatpush.bf16.msra.mxu0 %v365
    %375 = vmatpush.bf16.msra.mxu0 %v364
    %376 = vmatpush.bf16.msra.mxu0 %v363
    %377 = vmatpush.bf16.msra.mxu0 %v362
    %378 = vmatpush.bf16.msra.mxu0 %v361
    %379 = vmatpush.bf16.msra.mxu0 %v360
    %380 = vmatpush.bf16.msra.mxu0 %v359
    %381 = vmatpush.bf16.msra.mxu0 %v358
    %382 = vmatmul.bf16.gmra.mxu0 %v305
    %v383 = vpop.f32.mrf.mxu0
    %v384 = vadd.f32 %v324, %v383
    %v385 = vpop.f32.mrf.mxu0
    %386 = vdwg.mxu0
    %387 = vst [vmem:[#allocation11] sm:$0xff] %v384
    // Predicated region
    $region58: #{tpu_custom_call.1} parent=1 // pred_check
      _
    $region59: #{tpu_custom_call.1} parent=1 // pred_check_branch
      %389 = sbr.rel (0) target = $region61
    $region60: #{tpu_custom_call.1} parent=1 // pred_region
      %391 = vsyncadd [#allocation4], 0
      %s393 = sshll.u32 [#allocation11], 4
      %s394 = int_to_ptr.vmem [resolvable:$true] %s393
      %s395 = sshll.u32 %s9, 4
      %s396 = int_to_ptr.hbm [resolvable:$true] %s395
      %398 = dma.vmem_to_hbm [thread:$0]  %s394, 128, %s396, [#allocation4]
    $region61: #{tpu_custom_call.1} parent=1 // pred_fallthru
      _
    // Predicated region
    $region62: #{tpu_custom_call.1} parent=1 // pred_check
      _
    $region63: #{tpu_custom_call.1} parent=1 // pred_check_branch
      %400 = sbr.rel (0) target = $region65
    $region64: #{tpu_custom_call.1} parent=1 // pred_region
      %402 = dma.done [#allocation4], 128
    $region65: #{tpu_custom_call.1} parent=1 // pred_fallthru
      _
    %403 = vsyncpa [#allocation3], 1
    %404 = vsyncpa [#allocation6], 1
    %405 = vsyncpa [#allocation9], 1
    %406 = vsyncpa [#allocation4], 1

</llo_original>
